<compile_context>
chip_gen: v7x
topology: tpu7x:2x2x1
jax: 0.10.0
libtpu: 0.0.40
codegen_flags: <defaults>
</compile_context>

<pallas_src>
import functools

import jax
import jax.numpy as jnp
import numpy as np
from jax.experimental import pallas as pl
from jax.experimental.pallas import tpu as pltpu


_CONV_ROW_BUDGET = 4 << 20   # ~4 MiB per-step working set -> ~8-12 MiB double-buffered


# ----------------------------------------------------------------------------
# Pallas kernels
# ----------------------------------------------------------------------------

def _matmul_bias_kernel(*refs, n_in, act):
    """o = act(sum_i x_i @ w_i + b) on one M-tile (split-K across inputs).

    x_i:(TM,Ki) bf16, w_i:(Ki,N) bf16, b:(1,N) f32, o:(TM,N) bf16.
    """
    x_refs = refs[:n_in]
    w_refs = refs[n_in:2 * n_in]
    b_ref = refs[2 * n_in]
    o_ref = refs[2 * n_in + 1]
    acc = jnp.zeros(o_ref.shape, jnp.float32)
    for xr, wr in zip(x_refs, w_refs):
        acc = acc + jnp.dot(xr[...], wr[...], preferred_element_type=jnp.float32)
    acc = acc + b_ref[...]
    if act == "relu":
        acc = jnp.maximum(acc, 0.0)
    o_ref[...] = acc.astype(o_ref.dtype)


def matmul_bias(xs, ws, b, act="none", tm=1024):
    """Pallas matmul + bias (+ReLU), split-K across a list of operands.

    xs: (M,Ki) arrays (or a single array), ws: (Ki,N) weights, b: (N,).
    bf16 MXU operands, f32 accumulate, bf16 store.
    """
    if not isinstance(xs, (list, tuple)):
        xs, ws = [xs], [ws]
    xs = [x.astype(jnp.bfloat16) for x in xs]
    ws = [w.astype(jnp.bfloat16) for w in ws]
    M = xs[0].shape[0]
    N = ws[0].shape[1]
    TM = M
    if M > tm:
        for t in (tm, 1024, 512, 256, 128, 64, 32, 16, 8):
            if t <= tm and M % t == 0:
                TM = t
                break
    n_in = len(xs)
    in_specs = (
        [pl.BlockSpec((TM, x.shape[1]), lambda i: (i, 0)) for x in xs]
        + [pl.BlockSpec(tuple(w.shape), lambda i: (0, 0)) for w in ws]
        + [pl.BlockSpec((1, N), lambda i: (0, 0))]
    )
    return pl.pallas_call(
        functools.partial(_matmul_bias_kernel, n_in=n_in, act=act),
        out_shape=jax.ShapeDtypeStruct((M, N), jnp.bfloat16),
        grid=(M // TM,),
        in_specs=in_specs,
        out_specs=pl.BlockSpec((TM, N), lambda i: (i, 0)),
        compiler_params=pltpu.CompilerParams(dimension_semantics=("parallel",)),
    )(*xs, *ws, b.reshape(1, N).astype(jnp.float32))


def _conv3x3_kernel(x_ref, w_ref, b_ref, o_ref, *, TH, W, d, act):
    """'same' 3x3 conv on one (batch, row-tile) block with kx pre-merged into K.

    x_ref:(TH+2d, W, 3*Cin) bf16 (kx-shifted views concatenated on channels),
    w_ref:(3, 3*Cin, Cout) bf16, b_ref:(1,Cout) f32, o_ref:(TH*W, Cout) bf16.
    Only the H axis is sliced in-kernel (ky offsets), so no sublane-misaligned
    W slices; 3 wide MXU matmuls instead of 9 skinny ones.
    """
    acc = jnp.zeros(o_ref.shape, jnp.float32)
    for ky in range(3):
        xs = x_ref[ky * d:ky * d + TH, :, :].reshape(TH * W, -1)
        acc = acc + jnp.dot(xs, w_ref[ky], preferred_element_type=jnp.float32)
    acc = acc + b_ref[...]
    if act == "relu":
        acc = jnp.maximum(acc, 0.0)
    o_ref[...] = acc.astype(o_ref.dtype)


def _pick_row_tile(H, W, Cin3, Cout, d, budget):
    """Largest power-of-two divisor row tile whose working set fits the budget."""
    th = H

    def cost(t):
        # bf16 input block + bf16 output block + f32 accumulator
        return (t + 2 * d) * W * Cin3 * 2 + t * W * Cout * (2 + 4)

    while th % 2 == 0 and th > 8 and cost(th) > budget:
        th //= 2
    return th


def _conv3x3_fused(x, w3, b, act, dilation, row_budget):
    """x:(N,H,W,Cin), w3:(3, 3*Cin, Cout) kx-merged weights, b:(Cout,)."""
    N, H, W, C = x.shape
    Cout = w3.shape[-1]
    d = dilation
    xb = x.astype(jnp.bfloat16)
    xp = jnp.pad(xb, ((0, 0), (d, d), (d, d), (0, 0)))
    # kx-merge along channels: (N, H+2d, W, 3C).  The pad/slice/concat fuse in XLA.
    xk = jnp.concatenate([xp[:, :, kx * d:kx * d + W, :] for kx in range(3)], axis=-1)
    TH = _pick_row_tile(H, W, 3 * C, Cout, d, row_budget)
    nTH = H // TH
    if nTH == 1:
        xt = xk[:, None]                                       # (N,1,H+2d,W,3C)
    else:  # stacked overlapping row tiles (halo of 2d rows baked in)
        xt = jnp.stack([xk[:, t * TH:t * TH + TH + 2 * d] for t in range(nTH)], axis=1)

    out = pl.pallas_call(
        functools.partial(_conv3x3_kernel, TH=TH, W=W, d=d, act=act),
        out_shape=jax.ShapeDtypeStruct((N, nTH, TH * W, Cout), jnp.bfloat16),
        grid=(N, nTH),
        in_specs=[
            pl.BlockSpec((None, None, TH + 2 * d, W, 3 * C),
                         lambda n, t: (n, t, 0, 0, 0)),
            pl.BlockSpec((3, 3 * C, Cout), lambda n, t: (0, 0, 0)),
            pl.BlockSpec((1, Cout), lambda n, t: (0, 0)),
        ],
        out_specs=pl.BlockSpec((None, None, TH * W, Cout), lambda n, t: (n, t, 0, 0)),
        compiler_params=pltpu.CompilerParams(
            dimension_semantics=("parallel", "parallel")),
    )(xt, w3.astype(jnp.bfloat16), b.reshape(1, Cout).astype(jnp.float32))
    return out.reshape(N, H, W, Cout)


def _conv3x3_im2col(x, w3, b, act, dilation):
    """Fallback for W % 8 != 0 (tiny deep levels): im2col in XLA + Pallas matmul."""
    N, H, W, C = x.shape
    Cout = w3.shape[-1]
    d = dilation
    xp = jnp.pad(x.astype(jnp.bfloat16), ((0, 0), (d, d), (d, d), (0, 0)))
    cols = [xp[:, ky * d:ky * d + H, kx * d:kx * d + W, :]
            for ky in range(3) for kx in range(3)]
    patches = jnp.concatenate(cols, axis=-1).reshape(-1, 9 * C)
    # w3[ky, kx*C+ci, co] flattens to (ky*3+kx)*C+ci -> matches the patch order.
    y = matmul_bias(patches, w3.reshape(9 * C, Cout), b, act)
    return y.reshape(N, H, W, Cout)


def conv3x3(x, w3, b, act="none", dilation=1, row_budget=_CONV_ROW_BUDGET):
    # Fused path requires W % 8 == 0 so the in-kernel (TH,W,3C)->(TH*W,3C) reshape
    # is layout preserving; the 4x4 / 2x2 levels use the im2col fallback.
    if x.shape[2] % 8 == 0:
        return _conv3x3_fused(x, w3, b, act, dilation, row_budget)
    return _conv3x3_im2col(x, w3, b, act, dilation)


def conv1x1(x, w, b, act="none"):
    N, H, W, C = x.shape
    y = matmul_bias(x.reshape(-1, C), w, b, act)
    return y.reshape(N, H, W, -1)


def conv1x1_multi(xs, ws, b, act="none"):
    """1x1 conv over an implicit channel-concat of xs (split-K, no concat in HBM)."""
    N, H, W, _ = xs[0].shape
    flat = [x.reshape(-1, x.shape[-1]) for x in xs]
    y = matmul_bias(flat, ws, b, act)
    return y.reshape(N, H, W, -1)


def _msca_kernel(t1_ref, t2_ref, g_ref, wl1_ref, bl1_ref, wl2_ref, bl2_ref, o_ref):
    """Fused MSCA modulation on one (batch, row-tile) block:

    loc = (relu(t1 @ wl1 + bl1)) @ wl2 + bl2
    a   = sigmoid(loc + g)          (g = pre-computed global-branch logits)
    out = t2 * (t1 * a) + t2
    """
    t1 = t1_ref[...]                                   # (T, C) bf16
    h = jnp.dot(t1, wl1_ref[...], preferred_element_type=jnp.float32) + bl1_ref[...]
    h = jnp.maximum(h, 0.0).astype(jnp.bfloat16)
    loc = jnp.dot(h, wl2_ref[...], preferred_element_type=jnp.float32) + bl2_ref[...]
    a = jax.nn.sigmoid(loc + g_ref[...])               # (T,C) + (1,C)
    t1f = t1.astype(jnp.float32)
    t2 = t2_ref[...].astype(jnp.float32)
    o_ref[...] = (t2 * (t1f * a) + t2).astype(o_ref.dtype)


def msca_modulate(p, t1, t2):
    """Implements: temp = t1 * MSCA(t1); out = t2 * temp + t2 (one fused kernel)."""
    # TODO(synk): BlockMSCA assumed = MS-CAM style local(1x1->ReLU->1x1) +
    #             global(GAP->FC->ReLU->FC), sigmoid of the sum (BatchNorm omitted).
    N, H, W, C = t1.shape
    HW = H * W
    # Global branch: tiny (N, C) matmuls -> plain XLA (review: launch overhead > work).
    wg1, bg1 = p["g1"]
    wg2, bg2 = p["g2"]
    g = jnp.mean(t1.astype(jnp.float32), axis=(1, 2))                 # (N, C)
    g = jnp.maximum(g @ wg1.astype(jnp.float32) + bg1, 0.0)
    g = g @ wg2.astype(jnp.float32) + bg2                             # pre-sigmoid

    wl1, bl1 = p["l1"]
    wl2, bl2 = p["l2"]
    Ci = wl1.shape[1]
    T = HW
    if HW > 2048:
        for t in (2048, 1024, 512, 256, 128, 64, 32, 16, 8):
            if HW % t == 0:
                T = t
                break
    s3 = (N, HW, C)
    out = pl.pallas_call(
        _msca_kernel,
        out_shape=jax.ShapeDtypeStruct(s3, jnp.bfloat16),
        grid=(N, HW // T),
        in_specs=[
            pl.BlockSpec((None, T, C), lambda n, i: (n, i, 0)),
            pl.BlockSpec((None, T, C), lambda n, i: (n, i, 0)),
            pl.BlockSpec((None, 1, C), lambda n, i: (n, 0, 0)),   # resident per batch
            pl.BlockSpec((C, Ci), lambda n, i: (0, 0)),
            pl.BlockSpec((1, Ci), lambda n, i: (0, 0)),
            pl.BlockSpec((Ci, C), lambda n, i: (0, 0)),
            pl.BlockSpec((1, C), lambda n, i: (0, 0)),
        ],
        out_specs=pl.BlockSpec((None, T, C), lambda n, i: (n, i, 0)),
        compiler_params=pltpu.CompilerParams(
            dimension_semantics=("parallel", "parallel")),
    )(t1.astype(jnp.bfloat16).reshape(s3),
      t2.astype(jnp.bfloat16).reshape(s3),
      g.reshape(N, 1, C).astype(jnp.float32),
      wl1.astype(jnp.bfloat16), bl1.reshape(1, Ci).astype(jnp.float32),
      wl2.astype(jnp.bfloat16), bl2.reshape(1, C).astype(jnp.float32))
    return out.reshape(N, H, W, C)


# ----------------------------------------------------------------------------
# Sub-modules (functional).  Definitions assumed; see TODO(synk) notes.
# ----------------------------------------------------------------------------

def basic_block_down(p, x):
    # TODO(synk): BasicBlockDown assumed = conv3x3->ReLU->conv3x3->ReLU.
    x = conv3x3(x, *p["c1"], act="relu")
    return conv3x3(x, *p["c2"], act="relu")


def basic_block_up(p, x):
    # TODO(synk): BasicBlockUp assumed = conv3x3->ReLU->conv3x3->ReLU.
    x = conv3x3(x, *p["c1"], act="relu")
    return conv3x3(x, *p["c2"], act="relu")


def downsample(x):
    # TODO(synk): DownSample assumed = 2x2 max-pool, returning (pooled, pre-pool skip).
    # TODO(synk): could be fused into the preceding conv3x3 epilogue (second output).
    N, H, W, C = x.shape
    xd = x.reshape(N, H // 2, 2, W // 2, 2, C).max(axis=(2, 4))
    return xd, x


def _upsample2x(x):
    # TODO(synk): nearest-neighbour x2 upsampling assumed; left to XLA (fuses with
    # the conv3x3 wrapper's pad/kx-merge assembly).
    return jnp.repeat(jnp.repeat(x, 2, axis=1), 2, axis=2)


def upsample_r(p, x):
    # TODO(synk): UpSample_R assumed = nearest x2 upsample + conv3x3 (ch -> ch//2) + ReLU.
    return conv3x3(_upsample2x(x), *p["c"], act="relu")


def upsample_t(p, x, skip):
    # TODO(synk): UpSample_T assumed = upsample+conv3x3(ch->ch//2), concat skip, 1x1 fuse.
    y = conv3x3(_upsample2x(x), *p["c"], act="relu")
    wf, bf = p["fuse"]
    ch2 = y.shape[-1]
    # split-K 1x1 fuse over [conv_out, skip] -- no channel concat materialized.
    return conv1x1_multi([y, skip], [wf[:ch2], wf[ch2:]], bf, act="relu")


def drdb(p, x):
    # TODO(synk): DRDB assumed = 3 dilated(2) dense conv3x3 (growth 32) + 1x1 fuse + residual.
    c = x
    d1 = conv3x3(c, *p["d1"], act="relu", dilation=2)
    c = jnp.concatenate([c, d1], -1)
    d2 = conv3x3(c, *p["d2"], act="relu", dilation=2)
    c = jnp.concatenate([c, d2], -1)
    d3 = conv3x3(c, *p["d3"], act="relu", dilation=2)
    wf, bf = p["fuse"]
    ch = x.shape[-1]
    g = d1.shape[-1]
    ws = [wf[:ch], wf[ch:ch + g], wf[ch + g:ch + 2 * g], wf[ch + 2 * g:]]
    y = conv1x1_multi([x, d1, d2, d3], ws, bf)          # split-K: no final concat
    return x + y


# ----------------------------------------------------------------------------
# Parameter construction (deterministic, PyTorch-default-like uniform init).
# Conv3 weights are stored kx-merged as (3, 3*Cin, Cout) bf16:
#   w3[ky, kx*Cin + ci, co] == torch_weight[co, ci, ky, kx]
# Biases stay f32 (in-kernel epilogues are f32).
# ----------------------------------------------------------------------------

class ParamFactory:
    def __init__(self, key):
        self.key = key

    def _take(self):
        self.key, k = jax.random.split(self.key)
        return k

    def conv1(self, cin, cout):
        bound = 1.0 / np.sqrt(cin)
        w = jax.random.uniform(self._take(), (cin, cout), jnp.float32, -bound, bound)
        b = jax.random.uniform(self._take(), (cout,), jnp.float32, -bound, bound)
        return (w.astype(jnp.bfloat16), b)

    def conv3(self, cin, cout):
        bound = 1.0 / np.sqrt(cin * 9)
        w = jax.random.uniform(self._take(), (3, 3 * cin, cout), jnp.float32, -bound, bound)
        b = jax.random.uniform(self._take(), (cout,), jnp.float32, -bound, bound)
        return (w.astype(jnp.bfloat16), b)


def make_params(key, in_chan, out_chan, f):
    pf = ParamFactory(key)
    h = f // 2

    def bbd(cin, cout): return {"c1": pf.conv3(cin, cout), "c2": pf.conv3(cout, cout)}
    def bbu(ch): return {"c1": pf.conv3(ch, ch), "c2": pf.conv3(ch, ch)}
    def msca(ch):
        inter = max(ch // 4, 1)
        return {"l1": pf.conv1(ch, inter), "l2": pf.conv1(inter, ch),
                "g1": pf.conv1(ch, inter), "g2": pf.conv1(inter, ch)}
    def drdb_p(ch, g=32):
        return {"d1": pf.conv3(ch, g), "d2": pf.conv3(ch + g, g),
                "d3": pf.conv3(ch + 2 * g, g), "fuse": pf.conv1(ch + 3 * g, ch)}
    def upR(ch): return {"c": pf.conv3(ch, ch // 2)}
    def upT(ch): return {"c": pf.conv3(ch, ch // 2), "fuse": pf.conv1(ch + ch // 2, ch // 2)}

    return {
        "conv1T1": pf.conv1(in_chan, h), "conv1T2": pf.conv1(in_chan, h),
        "dT1_1": bbd(h, f), "dT1_2": bbd(f, 2 * f), "dT1_3": bbd(2 * f, 4 * f), "dT1_4": bbd(4 * f, 8 * f),
        "dT2_1": bbd(h, f), "dT2_2": bbd(f, 2 * f), "dT2_3": bbd(2 * f, 4 * f), "dT2_4": bbd(4 * f, 8 * f),
        "bottomT1": drdb_p(8 * f), "bottomT2": drdb_p(8 * f),
        "up4_T1": upR(8 * f), "u4_T1": bbu(4 * f), "up3_T1": upR(4 * f), "u3_T1": bbu(2 * f),
        "up2_T1": upR(2 * f), "u2_T1": bbu(f), "up1_T1": upR(f), "u1_T1": bbu(h),
        "up4_T2": upT(8 * f), "u4_T2": bbu(4 * f), "up3_T2": upT(4 * f), "u3_T2": bbu(2 * f),
        "up2_T2": upT(2 * f), "u2_T2": bbu(f), "up1_T2": upT(f), "u1_T2": bbu(h),
        "outconvT1": pf.conv1(h, out_chan), "outconvT2": pf.conv1(h, out_chan),
        "msca1": msca(f), "msca2": msca(2 * f), "msca3": msca(4 * f), "msca4": msca(8 * f),
        "mscaU4": msca(4 * f), "mscaU3": msca(2 * f), "mscaU2": msca(f), "mscaU1": msca(h),
        # note: self.bottom (BlockMSCA) exists in __init__ but is unused in forward().
    }


def outconv(x, w, b):
    # Cout = 1: keep in XLA (review: <2% lane utilisation through Pallas).
    return jnp.einsum("nhwc,co->nhwo", x.astype(jnp.float32), w.astype(jnp.float32)) + b


# ----------------------------------------------------------------------------
# UnetK forward
# ----------------------------------------------------------------------------

def unetk_forward(params, T1_nchw, T2_nchw):
    t1 = jnp.transpose(T1_nchw, (0, 2, 3, 1)).astype(jnp.float32)
    t2 = jnp.transpose(T2_nchw, (0, 2, 3, 1)).astype(jnp.float32)

    T1_x1 = conv1x1(t1, *params["conv1T1"])
    T2_x1 = conv1x1(t2, *params["conv1T2"])

    T1_x2, T1_y1 = downsample(basic_block_down(params["dT1_1"], T1_x1))
    T2_x2, T2_y1 = downsample(basic_block_down(params["dT2_1"], T2_x1))
    T12_x2 = msca_modulate(params["msca1"], T1_x2, T2_x2)

    T1_x3, T1_y2 = downsample(basic_block_down(params["dT1_2"], T1_x2))
    T2_x3, T2_y2 = downsample(basic_block_down(params["dT2_2"], T12_x2))
    T12_x3 = msca_modulate(params["msca2"], T1_x3, T2_x3)

    T1_x4, T1_y3 = downsample(basic_block_down(params["dT1_3"], T1_x3))
    T2_x4, T2_y3 = downsample(basic_block_down(params["dT2_3"], T12_x3))
    T12_x4 = msca_modulate(params["msca3"], T1_x4, T2_x4)

    T1_x5, T1_y4 = downsample(basic_block_down(params["dT1_4"], T1_x4))
    T2_x5, T2_y4 = downsample(basic_block_down(params["dT2_4"], T12_x4))
    T12_x5 = msca_modulate(params["msca4"], T1_x5, T2_x5)

    T1_x = drdb(params["bottomT1"], T1_x5)
    T2_x = drdb(params["bottomT2"], T12_x5)

    T1_1x = basic_block_up(params["u4_T1"], upsample_r(params["up4_T1"], T1_x))
    T2_1x = basic_block_up(params["u4_T2"], upsample_t(params["up4_T2"], T2_x, T2_y4))
    T12_x = msca_modulate(params["mscaU4"], T1_1x, T2_1x)

    T1_2x = basic_block_up(params["u3_T1"], upsample_r(params["up3_T1"], T1_1x))
    T2_2x = basic_block_up(params["u3_T2"], upsample_t(params["up3_T2"], T12_x, T2_y3))
    T12_x = msca_modulate(params["mscaU3"], T1_2x, T2_2x)

    T1_3x = basic_block_up(params["u2_T1"], upsample_r(params["up2_T1"], T1_2x))
    T2_3x = basic_block_up(params["u2_T2"], upsample_t(params["up2_T2"], T12_x, T2_y2))
    T12_x = msca_modulate(params["mscaU2"], T1_3x, T2_3x)

    T1_4x = basic_block_up(params["u1_T1"], upsample_r(params["up1_T1"], T1_3x))
    T2_4x = basic_block_up(params["u1_T2"], upsample_t(params["up1_T2"], T12_x, T2_y1))
    T12_x = msca_modulate(params["mscaU1"], T1_4x, T2_4x)

    out1 = outconv(T1_4x, *params["outconvT1"])
    out2 = outconv(T12_x, *params["outconvT2"])
    return (jnp.transpose(out1, (0, 3, 1, 2)),
            jnp.transpose(out2, (0, 3, 1, 2)))


# ----------------------------------------------------------------------------
# Correctness probes (exercise the row-tiled conv path, dilation, im2col
# fallback and split-K matmul before the full forward).
# ----------------------------------------------------------------------------

def _conv3x3_reference(x, w3, b, act="none", dilation=1):
    N, H, W, C = x.shape
    Cout = w3.shape[-1]
    d = dilation
    w9 = w3.reshape(3, 3, C, Cout).astype(jnp.float32)
    xp = jnp.pad(x.astype(jnp.float32), ((0, 0), (d, d), (d, d), (0, 0)))
    acc = jnp.zeros((N, H, W, Cout), jnp.float32) + b.astype(jnp.float32)
    for ky in range(3):
        for kx in range(3):
            acc = acc + jnp.einsum("nhwc,co->nhwo",
                                   xp[:, ky * d:ky * d + H, kx * d:kx * d + W, :],
                                   w9[ky, kx])
    if act == "relu":
        acc = jnp.maximum(acc, 0.0)
    return acc


def _probe_kernels():
    key = jax.random.PRNGKey(123)
    ks = jax.random.split(key, 8)

    # Fused conv3x3, forced row tiling (row_budget=1 -> TH=8, nTH=2).
    x = jax.random.normal(ks[0], (2, 16, 16, 4), jnp.float32).astype(jnp.bfloat16)
    w3 = (0.1 * jax.random.normal(ks[1], (3, 12, 8), jnp.float32)).astype(jnp.bfloat16)
    b = jnp.linspace(-0.1, 0.1, 8).astype(jnp.float32)
    y = conv3x3(x, w3, b, act="relu", dilation=1, row_budget=1)
    yr = _conv3x3_reference(x, w3, b, act="relu", dilation=1)
    np.testing.assert_allclose(np.asarray(y.astype(jnp.float32)), np.asarray(yr),
                               rtol=5e-2, atol=5e-2)

    # Fused conv3x3, dilation=2 (DRDB path), untiled.
    y = conv3x3(x, w3, b, act="none", dilation=2)
    yr = _conv3x3_reference(x, w3, b, act="none", dilation=2)
    np.testing.assert_allclose(np.asarray(y.astype(jnp.float32)), np.asarray(yr),
                               rtol=5e-2, atol=5e-2)

    # im2col fallback (W % 8 != 0).
    xs = jax.random.normal(ks[2], (1, 4, 4, 8), jnp.float32).astype(jnp.bfloat16)
    w3s = (0.1 * jax.random.normal(ks[3], (3, 24, 8), jnp.float32)).astype(jnp.bfloat16)
    y = conv3x3(xs, w3s, b, act="relu", dilation=1)
    yr = _conv3x3_reference(xs, w3s, b, act="relu", dilation=1)
    np.testing.assert_allclose(np.asarray(y.astype(jnp.float32)), np.asarray(yr),
                               rtol=5e-2, atol=5e-2)

    # Split-K matmul (used by DRDB / UpSample_T fuse).
    xa = jax.random.normal(ks[4], (64, 16), jnp.float32).astype(jnp.bfloat16)
    xb = jax.random.normal(ks[5], (64, 24), jnp.float32).astype(jnp.bfloat16)
    wa = (0.1 * jax.random.normal(ks[6], (16, 8), jnp.float32)).astype(jnp.bfloat16)
    wb = (0.1 * jax.random.normal(ks[7], (24, 8), jnp.float32)).astype(jnp.bfloat16)
    bb = jnp.linspace(-0.05, 0.05, 8).astype(jnp.float32)
    ym = matmul_bias([xa, xb], [wa, wb], bb, act="relu")
    ref = jnp.maximum(jnp.concatenate([xa, xb], 1).astype(jnp.float32)
                      @ jnp.concatenate([wa, wb], 0).astype(jnp.float32) + bb, 0.0)
    np.testing.assert_allclose(np.asarray(ym.astype(jnp.float32)), np.asarray(ref),
                               rtol=5e-2, atol=5e-2)


# ----------------------------------------------------------------------------
# Main
# ----------------------------------------------------------------------------

if __name__ == "__main__":
    _probe_kernels()

    in_chan, out_chan, filters = 1, 1, 8
    N, H, W = 2, 32, 32

    key = jax.random.PRNGKey(0)
    kp, k1, k2 = jax.random.split(key, 3)
    params = make_params(kp, in_chan, out_chan, filters)

    T1 = jax.random.normal(k1, (N, in_chan, H, W), jnp.float32)
    T2 = jax.random.normal(k2, (N, in_chan, H, W), jnp.float32)

    fwd = jax.jit(unetk_forward)
    o1, o2 = fwd(params, T1, T2)
    jax.block_until_ready((o1, o2))

    assert o1.shape == (N, out_chan, H, W), o1.shape
    assert o2.shape == (N, out_chan, H, W), o2.shape
    assert bool(jnp.all(jnp.isfinite(o1))) and bool(jnp.all(jnp.isfinite(o2)))
    print("KERNEL_OK")
</pallas_src>

<mosaic_0001>
module attributes {stable_mosaic.version = 11 : i64} {
  func.func @_conv3x3_kernel(%arg0: i32, %arg1: i32, %arg2: memref<1x1x10x16x12xbf16, #tpu.memory_space<vmem>>, %arg3: memref<3x12x8xbf16, #tpu.memory_space<vmem>>, %arg4: memref<1x8xf32, #tpu.memory_space<vmem>>, %arg5: memref<1x1x128x8xbf16, #tpu.memory_space<vmem>>) attributes {dimension_semantics = [#tpu.dimension_semantics<parallel>, #tpu.dimension_semantics<parallel>], iteration_bounds = array<i64: 2, 2>, scalar_prefetch = 0 : i64, scratch_operands = 0 : i64, tpu.core_type = #tpu.core_type<tc>, window_params = [{transform_indices = @transform_0, window_bounds = array<i64: 1, 1, 10, 16, 12>}, {pipeline_mode = #tpu.pipeline_mode<synchronous>, transform_indices = @transform_1, window_bounds = array<i64: 3, 12, 8>}, {pipeline_mode = #tpu.pipeline_mode<synchronous>, transform_indices = @transform_2, window_bounds = array<i64: 1, 8>}, {transform_indices = @transform_3, window_bounds = array<i64: 1, 1, 128, 8>}]} {
    %cst = arith.constant 0.000000e+00 : f32
    %0 = vector.broadcast %cst : f32 to vector<128x8xf32>
    %c0 = arith.constant 0 : index
    %c0_0 = arith.constant 0 : index
    %c0_1 = arith.constant 0 : index
    %c0_2 = arith.constant 0 : index
    %c0_3 = arith.constant 0 : index
    %1 = vector.load %arg2[%c0, %c0_0, %c0_1, %c0_2, %c0_3] : memref<1x1x10x16x12xbf16, #tpu.memory_space<vmem>>, vector<1x1x8x16x12xbf16>
    %2 = vector.shape_cast %1 : vector<1x1x8x16x12xbf16> to vector<8x16x12xbf16>
    %3 = vector.shape_cast %2 : vector<8x16x12xbf16> to vector<128x12xbf16>
    %c0_4 = arith.constant 0 : index
    %c0_5 = arith.constant 0 : index
    %c0_6 = arith.constant 0 : index
    %4 = vector.load %arg3[%c0_4, %c0_5, %c0_6] : memref<3x12x8xbf16, #tpu.memory_space<vmem>>, vector<1x12x8xbf16>
    %5 = vector.shape_cast %4 : vector<1x12x8xbf16> to vector<12x8xbf16>
    %cst_7 = arith.constant dense<0.000000e+00> : vector<128x8xf32>
    %6 = tpu.matmul %3, %5, %cst_7 {dimension_numbers = #tpu.dot_dimension_numbers<[1], [0], [0], [1], [0, 0, 1, 1], [], []>} : vector<128x12xbf16>, vector<12x8xbf16>, vector<128x8xf32> -> vector<128x8xf32>
    %7 = arith.addf %0, %6 : vector<128x8xf32>
    %c0_8 = arith.constant 0 : index
    %c0_9 = arith.constant 0 : index
    %c1 = arith.constant 1 : index
    %c0_10 = arith.constant 0 : index
    %c0_11 = arith.constant 0 : index
    %8 = vector.load %arg2[%c0_8, %c0_9, %c1, %c0_10, %c0_11] : memref<1x1x10x16x12xbf16, #tpu.memory_space<vmem>>, vector<1x1x8x16x12xbf16>
    %9 = vector.shape_cast %8 : vector<1x1x8x16x12xbf16> to vector<8x16x12xbf16>
    %10 = vector.shape_cast %9 : vector<8x16x12xbf16> to vector<128x12xbf16>
    %c1_12 = arith.constant 1 : index
    %c0_13 = arith.constant 0 : index
    %c0_14 = arith.constant 0 : index
    %11 = vector.load %arg3[%c1_12, %c0_13, %c0_14] : memref<3x12x8xbf16, #tpu.memory_space<vmem>>, vector<1x12x8xbf16>
    %12 = vector.shape_cast %11 : vector<1x12x8xbf16> to vector<12x8xbf16>
    %cst_15 = arith.constant dense<0.000000e+00> : vector<128x8xf32>
    %13 = tpu.matmul %10, %12, %cst_15 {dimension_numbers = #tpu.dot_dimension_numbers<[1], [0], [0], [1], [0, 0, 1, 1], [], []>} : vector<128x12xbf16>, vector<12x8xbf16>, vector<128x8xf32> -> vector<128x8xf32>
    %14 = arith.addf %7, %13 : vector<128x8xf32>
    %c0_16 = arith.constant 0 : index
    %c0_17 = arith.constant 0 : index
    %c2 = arith.constant 2 : index
    %c0_18 = arith.constant 0 : index
    %c0_19 = arith.constant 0 : index
    %15 = vector.load %arg2[%c0_16, %c0_17, %c2, %c0_18, %c0_19] : memref<1x1x10x16x12xbf16, #tpu.memory_space<vmem>>, vector<1x1x8x16x12xbf16>
    %16 = vector.shape_cast %15 : vector<1x1x8x16x12xbf16> to vector<8x16x12xbf16>
    %17 = vector.shape_cast %16 : vector<8x16x12xbf16> to vector<128x12xbf16>
    %c2_20 = arith.constant 2 : index
    %c0_21 = arith.constant 0 : index
    %c0_22 = arith.constant 0 : index
    %18 = vector.load %arg3[%c2_20, %c0_21, %c0_22] : memref<3x12x8xbf16, #tpu.memory_space<vmem>>, vector<1x12x8xbf16>
    %19 = vector.shape_cast %18 : vector<1x12x8xbf16> to vector<12x8xbf16>
    %cst_23 = arith.constant dense<0.000000e+00> : vector<128x8xf32>
    %20 = tpu.matmul %17, %19, %cst_23 {dimension_numbers = #tpu.dot_dimension_numbers<[1], [0], [0], [1], [0, 0, 1, 1], [], []>} : vector<128x12xbf16>, vector<12x8xbf16>, vector<128x8xf32> -> vector<128x8xf32>
    %21 = arith.addf %14, %20 : vector<128x8xf32>
    %c0_24 = arith.constant 0 : index
    %c0_25 = arith.constant 0 : index
    %22 = vector.load %arg4[%c0_24, %c0_25] : memref<1x8xf32, #tpu.memory_space<vmem>>, vector<1x8xf32>
    %23 = vector.broadcast %22 : vector<1x8xf32> to vector<128x8xf32>
    %24 = arith.addf %21, %23 : vector<128x8xf32>
    %cst_26 = arith.constant 0.000000e+00 : f32
    %25 = vector.broadcast %cst_26 : f32 to vector<128x8xf32>
    %26 = arith.maximumf %24, %25 : vector<128x8xf32>
    %27 = arith.truncf %26 : vector<128x8xf32> to vector<128x8xbf16>
    %c0_27 = arith.constant 0 : index
    %c0_28 = arith.constant 0 : index
    %c0_29 = arith.constant 0 : index
    %c0_30 = arith.constant 0 : index
    %28 = vector.load %arg5[%c0_27, %c0_28, %c0_29, %c0_30] : memref<1x1x128x8xbf16, #tpu.memory_space<vmem>>, vector<1x1x128x8xbf16>
    %29 = vector.shape_cast %28 : vector<1x1x128x8xbf16> to vector<128x8xbf16>
    %30 = vector.shape_cast %27 : vector<128x8xbf16> to vector<1x1x128x8xbf16>
    tpu.vector_store %arg5[%c0_27, %c0_28, %c0_29, %c0_30], %30 {strides = array<i32>} : memref<1x1x128x8xbf16, #tpu.memory_space<vmem>>, vector<1x1x128x8xbf16>,
    return
  }
  func.func @transform_0(%arg0: i32, %arg1: i32) -> (i32, i32, i32, i32, i32) {
    %c0_i32 = arith.constant 0 : i32
    %c0_i32_0 = arith.constant 0 : i32
    %c0_i32_1 = arith.constant 0 : i32
    %c0_i32_2 = arith.constant 0 : i32
    return %arg0, %arg1, %c0_i32, %c0_i32_0, %c0_i32_1 : i32, i32, i32, i32, i32
  }
  func.func @transform_1(%arg0: i32, %arg1: i32) -> (i32, i32, i32) {
    %c0_i32 = arith.constant 0 : i32
    %c0_i32_0 = arith.constant 0 : i32
    %c0_i32_1 = arith.constant 0 : i32
    %c0_i32_2 = arith.constant 0 : i32
    return %c0_i32, %c0_i32_0, %c0_i32_1 : i32, i32, i32
  }
  func.func @transform_2(%arg0: i32, %arg1: i32) -> (i32, i32) {
    %c0_i32 = arith.constant 0 : i32
    %c0_i32_0 = arith.constant 0 : i32
    %c0_i32_1 = arith.constant 0 : i32
    return %c0_i32, %c0_i32_0 : i32, i32
  }
  func.func @transform_3(%arg0: i32, %arg1: i32) -> (i32, i32, i32, i32) {
    %c0_i32 = arith.constant 0 : i32
    %c0_i32_0 = arith.constant 0 : i32
    %c0_i32_1 = arith.constant 0 : i32
    return %arg0, %arg1, %c0_i32, %c0_i32_0 : i32, i32, i32, i32
  }
}

</mosaic_0001>

<llo_original>
// kernel: tpu_custom_call.1
$region0: #{tpu_custom_call.1}
  #allocation0 [shape = 'u32[]', space=smem, size = 0x4, offset = 0x4, fixed_abs, tag = 'smem constant byte address 0x4 - core index']
  #allocation1 [shape = 'u32[144,128]{1,0:T(1,128)}', space=vmem, size = 0x12000, scoped, tag = 'internal scratch']
  %s0 = inlined_call_operand.vmem [shape: bf16[2,2,10,16,12], index: 0, kind: input, shape index: {}]
  %s1 = inlined_call_operand.vmem [shape: bf16[3,12,8], index: 1, kind: input, shape index: {}]
  %s2 = inlined_call_operand.vmem [shape: f32[1,8], index: 2, kind: input, shape index: {}]
  %s3 = inlined_call_operand.vmem [shape: bf16[2,2,128,8], index: 3, kind: output, shape index: {}]
  %s4 = sld [smem:[#allocation0]]
  $region45: #{tpu_custom_call.1} parent=0
    _
  %s6 = ssub.s32 1, %s4
  %s7 = scalar_select 0, %s6, %s4
  loop: start=0, step=1, limit=6
  $region2: #{tpu_custom_call.1} parent=0 // loop_pre_header
    _
  $region3: #{tpu_custom_call.1} parent=0 // loop_header
    %s9 = sphi 0, %s13
    %p10 = scmp.ge.s32.totalorder %s9, 6
    %s16 = sphi 0, %s28
    %s17 = sphi 0, %s24
    %s18 = sphi 0, %s16
    %s19 = sphi 0, %s17
    %s20 = sphi 0, %s18
    %s21 = sphi 0, %s19
    %s33 = sphi 0, %s35
    %s36 = sphi 0, %s33
    %s37 = sphi 0, %s36
    %s53 = sphi 0, %s37
    %s57 = sphi 0, %s57
    %s59 = sphi 0, %s57
    %s60 = sphi 0, %s59
    %s74 = sphi 0, %s60
    %s78 = sphi 0, %s78
    %s80 = sphi 0, %s78
    %s81 = sphi 0, %s80
    %s95 = sphi 0, %s81
    %s103 = sphi 0, %s105
    %s106 = sphi 0, %s103
    %s107 = sphi 0, %s106
    %s123 = sphi 0, %s107
  $region4: #{tpu_custom_call.1} parent=0 // loop_header_branch
    %12 = sbr.rel (%p10) target = $region8
  $region5: #{tpu_custom_call.1} parent=0 // loop_body
    %s14 = ssub.s32 %s9, 1
    %s15 = ssub.s32 %s9, 2
    %s22 = sadd.s32 1, %s17
    %p23 = scmp.ge.s32.totalorder %s22, 2
    %s24 = scalar_select %p23, 0, %s22
    %s25 = sadd.s32 1, %s16
    %s26 = scalar_select %p23, %s25, %s16
    %p27 = scmp.ge.s32.totalorder %s26, 2
    %s28 = scalar_select %p27, 0, %s26
    %s29 = ssub.s32 %s16, %s28
    %s30 = ssub.s32 %s17, %s24
    %s31 = sor.u32 %s29, %s30
    %p32 = scmp.eq.s32.totalorder %s31, 0
    %s34 = sadd.s32 %s33, 1
    %s35 = scalar_select %p32, %s33, %s34
    %p38 = pneg %p32
    %p39 = scmp.eq.s32.totalorder %s9, 3
    %p40 = por %p38, %p39
    %p41 = scmp.ne.s32.totalorder %s33, %s36
    %p42 = scmp.eq.s32.totalorder %s9, 0
    %p43 = por %p41, %p42
    %p44 = scmp.ne.s32.totalorder %s33, %s36
    %p45 = scmp.eq.s32.totalorder %s14, 3
    %p46 = por %p44, %p45
    %p47 = scmp.ne.s32.totalorder %s36, %s37
    %p48 = scmp.eq.s32.totalorder %s14, 0
    %p49 = por %p47, %p48
    %p50 = scmp.ne.s32.totalorder %s36, %s37
    %p51 = scmp.eq.s32.totalorder %s15, 3
    %p52 = por %p50, %p51
    %p54 = scmp.ne.s32.totalorder %s37, %s53
    %p55 = scmp.eq.s32.totalorder %s15, 0
    %p56 = por %p54, %p55
    %s58 = sadd.s32 %s57, 1
    %p61 = scmp.eq.s32.totalorder %s9, 3
    %p62 = scmp.ne.s32.totalorder %s57, %s59
    %p63 = scmp.eq.s32.totalorder %s9, 0
    %p64 = por %p62, %p63
    %p65 = scmp.ne.s32.totalorder %s57, %s59
    %p66 = scmp.eq.s32.totalorder %s14, 3
    %p67 = por %p65, %p66
    %p68 = scmp.ne.s32.totalorder %s59, %s60
    %p69 = scmp.eq.s32.totalorder %s14, 0
    %p70 = por %p68, %p69
    %p71 = scmp.ne.s32.totalorder %s59, %s60
    %p72 = scmp.eq.s32.totalorder %s15, 3
    %p73 = por %p71, %p72
    %p75 = scmp.ne.s32.totalorder %s60, %s74
    %p76 = scmp.eq.s32.totalorder %s15, 0
    %p77 = por %p75, %p76
    %s79 = sadd.s32 %s78, 1
    %p82 = scmp.eq.s32.totalorder %s9, 3
    %p83 = scmp.ne.s32.totalorder %s78, %s80
    %p84 = scmp.eq.s32.totalorder %s9, 0
    %p85 = por %p83, %p84
    %p86 = scmp.ne.s32.totalorder %s78, %s80
    %p87 = scmp.eq.s32.totalorder %s14, 3
    %p88 = por %p86, %p87
    %p89 = scmp.ne.s32.totalorder %s80, %s81
    %p90 = scmp.eq.s32.totalorder %s14, 0
    %p91 = por %p89, %p90
    %p92 = scmp.ne.s32.totalorder %s80, %s81
    %p93 = scmp.eq.s32.totalorder %s15, 3
    %p94 = por %p92, %p93
    %p96 = scmp.ne.s32.totalorder %s81, %s95
    %p97 = scmp.eq.s32.totalorder %s15, 0
    %p98 = por %p96, %p97
    %s99 = ssub.s32 %s16, %s28
    %s100 = ssub.s32 %s17, %s24
    %s101 = sor.u32 %s99, %s100
    %p102 = scmp.eq.s32.totalorder %s101, 0
    %s104 = sadd.s32 %s103, 1
    %s105 = scalar_select %p102, %s103, %s104
    %p108 = pneg %p102
    %p109 = scmp.eq.s32.totalorder %s9, 3
    %p110 = por %p108, %p109
    %p111 = scmp.ne.s32.totalorder %s103, %s106
    %p112 = scmp.eq.s32.totalorder %s9, 0
    %p113 = por %p111, %p112
    %p114 = scmp.ne.s32.totalorder %s103, %s106
    %p115 = scmp.eq.s32.totalorder %s14, 3
    %p116 = por %p114, %p115
    %p117 = scmp.ne.s32.totalorder %s106, %s107
    %p118 = scmp.eq.s32.totalorder %s14, 0
    %p119 = por %p117, %p118
    %p120 = scmp.ne.s32.totalorder %s106, %s107
    %p121 = scmp.eq.s32.totalorder %s15, 3
    %p122 = por %p120, %p121
    %p124 = scmp.ne.s32.totalorder %s107, %s123
    %p125 = scmp.eq.s32.totalorder %s15, 0
    %p126 = por %p124, %p125
    %p127 = scmp.le.s32.totalorder 1, %s9
    %p128 = scmp.lt.s32.totalorder %s9, 5
    %p129 = pnand %p127, %p128
    %p130 = pneg %p129
    // Predicated region
    $region9: #{tpu_custom_call.1} parent=5 // pred_check
      _
    $region10: #{tpu_custom_call.1} parent=5 // pred_check_branch
      %132 = sbr.rel (%p129) target = $region12
    $region11: #{tpu_custom_call.1} parent=5 // pred_region
      %s133 = ssub.s32 %s9, 1
      // Predicated region
      $region13: #{tpu_custom_call.1} parent=11 // pred_check
        %p134 = pneg %p70
      $region14: #{tpu_custom_call.1} parent=11 // pred_check_branch
        %136 = sbr.rel (%p134) target = $region16
      $region15: #{tpu_custom_call.1} parent=11 // pred_region
        _
      $region16: #{tpu_custom_call.1} parent=11 // pred_fallthru
        _
      // Predicated region
      $region17: #{tpu_custom_call.1} parent=11 // pred_check
        %p137 = pneg %p91
      $region18: #{tpu_custom_call.1} parent=11 // pred_check_branch
        %139 = sbr.rel (%p137) target = $region20
      $region19: #{tpu_custom_call.1} parent=11 // pred_region
        _
      $region20: #{tpu_custom_call.1} parent=11 // pred_fallthru
        _
    $region12: #{tpu_custom_call.1} parent=5 // pred_fallthru
      _
    %p140 = scmp.lt.s32.totalorder %s9, 4
    // Predicated region
    $region21: #{tpu_custom_call.1} parent=5 // pred_check
      %p141 = pneg %p140
    $region22: #{tpu_custom_call.1} parent=5 // pred_check_branch
      %143 = sbr.rel (%p141) target = $region24
    $region23: #{tpu_custom_call.1} parent=5 // pred_region
      // Predicated region
      $region25: #{tpu_custom_call.1} parent=23 // pred_check
        %p144 = pneg %p43
      $region26: #{tpu_custom_call.1} parent=23 // pred_check_branch
        %146 = sbr.rel (%p144) target = $region28
      $region27: #{tpu_custom_call.1} parent=23 // pred_region
        %p147 = scmp.lt.s32.totalorder %s16, 1
        %s148 = scalar_select %p147, %s16, 1
        %p149 = scmp.lt.s32.totalorder %s17, 1
        %s150 = scalar_select %p149, %s17, 1
        %s151 = smul.addr %s150, 20
        %s152 = smul.addr %s148, 40
        %s153 = sadd.s32 %s151, %s152
        %s154 = smul.addr %s153, 4
        %s155 = scalar_lea.vmem %s0, %s154
      $region28: #{tpu_custom_call.1} parent=23 // pred_fallthru
        _
    $region24: #{tpu_custom_call.1} parent=5 // pred_fallthru
      _
    %p156 = scmp.le.s32.totalorder 1, %s9
    %p157 = scmp.lt.s32.totalorder %s9, 5
    %p158 = pnand %p156, %p157
    %p159 = pneg %p158
    // Predicated region
    $region29: #{tpu_custom_call.1} parent=5 // pred_check
      _
    $region30: #{tpu_custom_call.1} parent=5 // pred_check_branch
      %161 = sbr.rel (%p158) target = $region32
    $region31: #{tpu_custom_call.1} parent=5 // pred_region
      %s162 = ssub.s32 %s9, 1
      %p163 = scmp.lt.s32.totalorder %s18, 1
      %s164 = scalar_select %p163, %s18, 1
      %p165 = scmp.lt.s32.totalorder %s19, 1
      %s166 = scalar_select %p165, %s19, 1
      %s167 = smul.addr %s166, 20
      %s168 = smul.addr %s164, 40
      %s169 = sadd.s32 %s167, %s168
      %s170 = smul.addr %s169, 4
      %s171 = scalar_lea.vmem %s0, %s170
      %p172 = pneg %p49
      %p173 = pneg %p46
      %p174 = pneg %p70
      %p175 = pneg %p67
      %p176 = pneg %p91
      %p177 = pneg %p88
      %p178 = pneg %p119
      %p179 = pneg %p116
      %p180 = scmp.lt.s32.totalorder %s18, 1
      %s181 = scalar_select %p180, %s18, 1
      %p182 = scmp.lt.s32.totalorder %s19, 1
      %s183 = scalar_select %p182, %s19, 1
      %s184 = smul.addr %s183, 16
      %s185 = smul.addr %s181, 32
      %s186 = sadd.s32 %s184, %s185
      %s187 = smul.addr %s186, 4
      %s188 = scalar_lea.vmem %s3, %s187
      %p189 = scmp.lt.s32.totalorder %s18, 1
      %s190 = scalar_select %p189, %s18, 1
      %p191 = scmp.lt.s32.totalorder %s19, 1
      %s192 = scalar_select %p191, %s19, 1
      %s193 = smul.addr %s192, 20
      %s194 = smul.addr %s190, 40
      %s195 = sadd.s32 %s193, %s194
      %s196 = smul.addr %s195, 4
      %s197 = scalar_lea.vmem %s0, %s196
      %p198 = scmp.lt.s32.totalorder %s18, 1
      %s199 = scalar_select %p198, %s18, 1
      %p200 = scmp.lt.s32.totalorder %s19, 1
      %s201 = scalar_select %p200, %s19, 1
      %s202 = smul.addr %s201, 16
      %s203 = smul.addr %s199, 32
      %s204 = sadd.s32 %s202, %s203
      %s205 = smul.addr %s204, 4
      %s206 = scalar_lea.vmem %s3, %s205
      %v208 = vld [vmem:[%s197] sm:$0xf]
      %v209 = vld [vmem:[%s197 + $0x4] sm:$0xf]
      %v210 = vld [vmem:[%s197 + $0x8] sm:$0xf]
      %v211 = vld [vmem:[%s197 + $0xc] sm:$0xf]
      %v212 = vld [vmem:[%s197 + $0x10] sm:$0xf]
      %v213 = vld [vmem:[%s197 + $0x14] sm:$0xf]
      %v214 = vld [vmem:[%s197 + $0x18] sm:$0xf]
      %v215 = vld [vmem:[%s197 + $0x1c] sm:$0xf]
      %v216 = vld [vmem:[%s197 + $0x20] sm:$0xf]
      %v217 = vld [vmem:[%s197 + $0x24] sm:$0xf]
      %v218 = vld [vmem:[%s197 + $0x28] sm:$0xf]
      %v219 = vld [vmem:[%s197 + $0x2c] sm:$0xf]
      %v220 = vld [vmem:[%s197 + $0x30] sm:$0xf]
      %v221 = vld [vmem:[%s197 + $0x34] sm:$0xf]
      %v222 = vld [vmem:[%s197 + $0x38] sm:$0xf]
      %v223 = vld [vmem:[%s197 + $0x3c] sm:$0xf]
      %v224 = vld [vmem:[%s1] sm:$0xf]
      %v225 = vld [vmem:[%s1 + $0x4] sm:$0x3]
      %s226 = scalar_lea.vmem %s197, 8
      %v227 = vld [vmem:[%s226] sm:$0xf]
      %v228 = vld [vmem:[%s226 + $0x4] sm:$0xf]
      %v229 = vld [vmem:[%s226 + $0x8] sm:$0xf]
      %v230 = vld [vmem:[%s226 + $0xc] sm:$0xf]
      %v231 = vld [vmem:[%s226 + $0x10] sm:$0xf]
      %v232 = vld [vmem:[%s226 + $0x14] sm:$0xf]
      %v233 = vld [vmem:[%s226 + $0x18] sm:$0xf]
      %v234 = vld [vmem:[%s226 + $0x1c] sm:$0xf]
      %v235 = vld [vmem:[%s226 + $0x20] sm:$0xf]
      %v236 = vld [vmem:[%s226 + $0x24] sm:$0xf]
      %v237 = vld [vmem:[%s226 + $0x28] sm:$0xf]
      %v238 = vld [vmem:[%s226 + $0x2c] sm:$0xf]
      %v239 = vld [vmem:[%s226 + $0x30] sm:$0xf]
      %v240 = vld [vmem:[%s226 + $0x34] sm:$0xf]
      %v241 = vld [vmem:[%s226 + $0x38] sm:$0xf]
      %v242 = vld [vmem:[%s226 + $0x3c] sm:$0xf]
      %s243 = scalar_lea.vmem %s1, 8
      %v244 = vld [vmem:[%s243] sm:$0xf]
      %v245 = vld [vmem:[%s243 + $0x4] sm:$0x3]
      %v262 = vunpack.c.l.b16 %v227
      %v263 = vunpack.c.l.b16 %v228
      %v264 = vunpack.c.l.b16 %v229
      %v265 = vunpack.c.l.b16 %v230
      %v266 = vunpack.c.l.b16 %v231
      %v267 = vunpack.c.l.b16 %v232
      %v268 = vunpack.c.l.b16 %v233
      %v269 = vunpack.c.l.b16 %v234
      %v270 = vunpack.c.l.b16 %v235
      %v271 = vunpack.c.l.b16 %v236
      %v272 = vunpack.c.l.b16 %v237
      %v273 = vunpack.c.l.b16 %v238
      %v274 = vunpack.c.l.b16 %v239
      %v275 = vunpack.c.l.b16 %v240
      %v276 = vunpack.c.l.b16 %v241
      %v277 = vunpack.c.l.b16 %v242
      %v278 = vpack.c.b16 %v263, %v262
      %v279 = vpack.c.b16 %v265, %v264
      %v280 = vpack.c.b16 %v267, %v266
      %v281 = vpack.c.b16 %v269, %v268
      %v282 = vpack.c.b16 %v271, %v270
      %v283 = vpack.c.b16 %v273, %v272
      %v284 = vpack.c.b16 %v275, %v274
      %v285 = vpack.c.b16 %v277, %v276
      %v288 = vunpack.c.l.b16 %v244
      %v289 = vunpack.c.l.b16 %v245
      %v290 = vpack.c.b16 %v289, %v288
      %vm291 = vcmask 97280
      %v293 = vsel %vm291, %v278, 0
      %v296 = vsel %vm291, %v279, 0
      %v299 = vsel %vm291, %v280, 0
      %v302 = vsel %vm291, %v281, 0
      %v305 = vsel %vm291, %v282, 0
      %v308 = vsel %vm291, %v283, 0
      %v311 = vsel %vm291, %v284, 0
      %v314 = vsel %vm291, %v285, 0
      %vm316 = vcmask 1045504
      %v318 = vsel %vm316, %v290, 0
      %320 = vmatprep.subr.bf16.mxu0 0
      %321 = vmatpush1.bf16.msra.mxu0 %v318
      %322 = vmatprep.subr.bf16.mxu0 0
      %323 = vmatpush1.bf16.msra.mxu0 0
      %324 = vmatprep.subr.bf16.mxu0 0
      %325 = vmatpush1.bf16.msra.mxu0 0
      %326 = vmatprep.subr.bf16.mxu0 0
      %327 = vmatpush1.bf16.msra.mxu0 0
      %328 = vmatprep.subr.bf16.mxu0 0
      %329 = vmatpush1.bf16.msra.mxu0 0
      %330 = vmatprep.subr.bf16.mxu0 0
      %331 = vmatpush1.bf16.msra.mxu0 0
      %332 = vmatprep.subr.bf16.mxu0 0
      %333 = vmatpush1.bf16.msra.mxu0 0
      %334 = vmatprep.subr.bf16.mxu0 0
      %335 = vmatpush1.bf16.msra.mxu0 0
      %336 = vmatprep.subr.bf16.mxu0 0
      %337 = vmatpush1.bf16.msra.mxu0 0
      %338 = vmatprep.subr.bf16.mxu0 0
      %339 = vmatpush1.bf16.msra.mxu0 0
      %340 = vmatprep.subr.bf16.mxu0 0
      %341 = vmatpush1.bf16.msra.mxu0 0
      %342 = vmatprep.subr.bf16.mxu0 0
      %343 = vmatpush1.bf16.msra.mxu0 0
      %344 = vmatprep.subr.bf16.mxu0 0
      %345 = vmatpush1.bf16.msra.mxu0 0
      %346 = vmatprep.subr.bf16.mxu0 0
      %347 = vmatpush1.bf16.msra.mxu0 0
      %348 = vmatprep.subr.bf16.mxu0 0
      %349 = vmatpush1.bf16.msra.mxu0 0
      %350 = vmatprep.subr.bf16.mxu0 0
      %351 = vmatpush1.bf16.msra.mxu0 0
      %352 = vmatprep.mubr.bf16.mxu0 0
      %353 = vmatmul.mubr.bf16.gmra.mrb[0].mxu0 %v293
      %v354 = vpop.f32.mrb[0].mxu0
      %v355 = vadd.f32 0.0, %v354
      %v356 = vpop.f32.mrb[0].mxu0
      %v357 = vpop.f32.mrb[0].mxu0
      %v358 = vadd.f32 0.0, %v357
      %v359 = vpop.f32.mrb[0].mxu0
      %360 = vmatprep.mubr.bf16.mxu0 0
      %361 = vmatmul.mubr.bf16.gmra.mrb[0].mxu0 %v296
      %v362 = vpop.f32.mrb[0].mxu0
      %v363 = vadd.f32 0.0, %v362
      %v364 = vpop.f32.mrb[0].mxu0
      %v365 = vpop.f32.mrb[0].mxu0
      %v366 = vadd.f32 0.0, %v365
      %v367 = vpop.f32.mrb[0].mxu0
      %368 = vmatprep.mubr.bf16.mxu0 0
      %369 = vmatmul.mubr.bf16.gmra.mrb[0].mxu0 %v299
      %v370 = vpop.f32.mrb[0].mxu0
      %v371 = vadd.f32 0.0, %v370
      %v372 = vpop.f32.mrb[0].mxu0
      %v373 = vpop.f32.mrb[0].mxu0
      %v374 = vadd.f32 0.0, %v373
      %v375 = vpop.f32.mrb[0].mxu0
      %376 = vmatprep.mubr.bf16.mxu0 0
      %377 = vmatmul.mubr.bf16.gmra.mrb[0].mxu0 %v302
      %v378 = vpop.f32.mrb[0].mxu0
      %v379 = vadd.f32 0.0, %v378
      %v380 = vpop.f32.mrb[0].mxu0
      %v381 = vpop.f32.mrb[0].mxu0
      %v382 = vadd.f32 0.0, %v381
      %v383 = vpop.f32.mrb[0].mxu0
      %384 = vmatprep.mubr.bf16.mxu0 0
      %385 = vmatmul.mubr.bf16.gmra.mrb[0].mxu0 %v305
      %v386 = vpop.f32.mrb[0].mxu0
      %v387 = vadd.f32 0.0, %v386
      %v388 = vpop.f32.mrb[0].mxu0
      %v389 = vpop.f32.mrb[0].mxu0
      %v390 = vadd.f32 0.0, %v389
      %v391 = vpop.f32.mrb[0].mxu0
      %392 = vmatprep.mubr.bf16.mxu0 0
      %393 = vmatmul.mubr.bf16.gmra.mrb[0].mxu0 %v308
      %v394 = vpop.f32.mrb[0].mxu0
      %v395 = vadd.f32 0.0, %v394
      %v396 = vpop.f32.mrb[0].mxu0
      %v397 = vpop.f32.mrb[0].mxu0
      %v398 = vadd.f32 0.0, %v397
      %v399 = vpop.f32.mrb[0].mxu0
      %400 = vmatprep.mubr.bf16.mxu0 0
      %401 = vmatmul.mubr.bf16.gmra.mrb[0].mxu0 %v311
      %v402 = vpop.f32.mrb[0].mxu0
      %v403 = vadd.f32 0.0, %v402
      %v404 = vpop.f32.mrb[0].mxu0
      %v405 = vpop.f32.mrb[0].mxu0
      %v406 = vadd.f32 0.0, %v405
      %v407 = vpop.f32.mrb[0].mxu0
      %408 = vmatprep.mubr.bf16.mxu0 0
      %409 = vmatmul.mubr.bf16.gmra.mrb[0].mxu0 %v314
      %v410 = vpop.f32.mrb[0].mxu0
      %v411 = vadd.f32 0.0, %v410
      %v412 = vpop.f32.mrb[0].mxu0
      %v413 = vpop.f32.mrb[0].mxu0
      %v414 = vadd.f32 0.0, %v413
      %v415 = vpop.f32.mrb[0].mxu0
      %416 = vdwg.mxu0
      %v433 = vunpack.c.l.b16 %v208
      %v434 = vunpack.c.l.b16 %v209
      %v435 = vunpack.c.l.b16 %v210
      %v436 = vunpack.c.l.b16 %v211
      %v437 = vunpack.c.l.b16 %v212
      %v438 = vunpack.c.l.b16 %v213
      %v439 = vunpack.c.l.b16 %v214
      %v440 = vunpack.c.l.b16 %v215
      %v441 = vunpack.c.l.b16 %v216
      %v442 = vunpack.c.l.b16 %v217
      %v443 = vunpack.c.l.b16 %v218
      %v444 = vunpack.c.l.b16 %v219
      %v445 = vunpack.c.l.b16 %v220
      %v446 = vunpack.c.l.b16 %v221
      %v447 = vunpack.c.l.b16 %v222
      %v448 = vunpack.c.l.b16 %v223
      %v449 = vpack.c.b16 %v434, %v433
      %v450 = vpack.c.b16 %v436, %v435
      %v451 = vpack.c.b16 %v438, %v437
      %v452 = vpack.c.b16 %v440, %v439
      %v453 = vpack.c.b16 %v442, %v441
      %v454 = vpack.c.b16 %v444, %v443
      %v455 = vpack.c.b16 %v446, %v445
      %v456 = vpack.c.b16 %v448, %v447
      %v459 = vunpack.c.l.b16 %v224
      %v460 = vunpack.c.l.b16 %v225
      %v461 = vpack.c.b16 %v460, %v459
      %v463 = vsel %vm291, %v449, 0
      %v466 = vsel %vm291, %v450, 0
      %v469 = vsel %vm291, %v451, 0
      %v472 = vsel %vm291, %v452, 0
      %v475 = vsel %vm291, %v453, 0
      %v478 = vsel %vm291, %v454, 0
      %v481 = vsel %vm291, %v455, 0
      %v484 = vsel %vm291, %v456, 0
      %v487 = vsel %vm316, %v461, 0
      %489 = vmatprep.subr.bf16.mxu0 0
      %490 = vmatpush1.bf16.msra.mxu0 %v487
      %491 = vmatprep.subr.bf16.mxu0 0
      %492 = vmatpush1.bf16.msra.mxu0 0
      %493 = vmatprep.subr.bf16.mxu0 0
      %494 = vmatpush1.bf16.msra.mxu0 0
      %495 = vmatprep.subr.bf16.mxu0 0
      %496 = vmatpush1.bf16.msra.mxu0 0
      %497 = vmatprep.subr.bf16.mxu0 0
      %498 = vmatpush1.bf16.msra.mxu0 0
      %499 = vmatprep.subr.bf16.mxu0 0
      %500 = vmatpush1.bf16.msra.mxu0 0
      %501 = vmatprep.subr.bf16.mxu0 0
      %502 = vmatpush1.bf16.msra.mxu0 0
      %503 = vmatprep.subr.bf16.mxu0 0
      %504 = vmatpush1.bf16.msra.mxu0 0
      %505 = vmatprep.subr.bf16.mxu0 0
      %506 = vmatpush1.bf16.msra.mxu0 0
      %507 = vmatprep.subr.bf16.mxu0 0
      %508 = vmatpush1.bf16.msra.mxu0 0
      %509 = vmatprep.subr.bf16.mxu0 0
      %510 = vmatpush1.bf16.msra.mxu0 0
      %511 = vmatprep.subr.bf16.mxu0 0
      %512 = vmatpush1.bf16.msra.mxu0 0
      %513 = vmatprep.subr.bf16.mxu0 0
      %514 = vmatpush1.bf16.msra.mxu0 0
      %515 = vmatprep.subr.bf16.mxu0 0
      %516 = vmatpush1.bf16.msra.mxu0 0
      %517 = vmatprep.subr.bf16.mxu0 0
      %518 = vmatpush1.bf16.msra.mxu0 0
      %519 = vmatprep.subr.bf16.mxu0 0
      %520 = vmatpush1.bf16.msra.mxu0 0
      %521 = vmatprep.mubr.bf16.mxu0 0
      %522 = vmatmul.mubr.bf16.gmra.mrb[0].mxu0 %v463
      %v523 = vpop.f32.mrb[0].mxu0
      %v524 = vadd.f32 %v355, %v523
      %v525 = vpop.f32.mrb[0].mxu0
      %v526 = vpop.f32.mrb[0].mxu0
      %v527 = vadd.f32 %v358, %v526
      %v528 = vpop.f32.mrb[0].mxu0
      %529 = vmatprep.mubr.bf16.mxu0 0
      %530 = vmatmul.mubr.bf16.gmra.mrb[0].mxu0 %v466
      %v531 = vpop.f32.mrb[0].mxu0
      %v532 = vadd.f32 %v363, %v531
      %v533 = vpop.f32.mrb[0].mxu0
      %v534 = vpop.f32.mrb[0].mxu0
      %v535 = vadd.f32 %v366, %v534
      %v536 = vpop.f32.mrb[0].mxu0
      %537 = vmatprep.mubr.bf16.mxu0 0
      %538 = vmatmul.mubr.bf16.gmra.mrb[0].mxu0 %v469
      %v539 = vpop.f32.mrb[0].mxu0
      %v540 = vadd.f32 %v371, %v539
      %v541 = vpop.f32.mrb[0].mxu0
      %v542 = vpop.f32.mrb[0].mxu0
      %v543 = vadd.f32 %v374, %v542
      %v544 = vpop.f32.mrb[0].mxu0
      %545 = vmatprep.mubr.bf16.mxu0 0
      %546 = vmatmul.mubr.bf16.gmra.mrb[0].mxu0 %v472
      %v547 = vpop.f32.mrb[0].mxu0
      %v548 = vadd.f32 %v379, %v547
      %v549 = vpop.f32.mrb[0].mxu0
      %v550 = vpop.f32.mrb[0].mxu0
      %v551 = vadd.f32 %v382, %v550
      %v552 = vpop.f32.mrb[0].mxu0
      %553 = vmatprep.mubr.bf16.mxu0 0
      %554 = vmatmul.mubr.bf16.gmra.mrb[0].mxu0 %v475
      %v555 = vpop.f32.mrb[0].mxu0
      %v556 = vadd.f32 %v387, %v555
      %v557 = vpop.f32.mrb[0].mxu0
      %v558 = vpop.f32.mrb[0].mxu0
      %v559 = vadd.f32 %v390, %v558
      %v560 = vpop.f32.mrb[0].mxu0
      %561 = vmatprep.mubr.bf16.mxu0 0
      %562 = vmatmul.mubr.bf16.gmra.mrb[0].mxu0 %v478
      %v563 = vpop.f32.mrb[0].mxu0
      %v564 = vadd.f32 %v395, %v563
      %v565 = vpop.f32.mrb[0].mxu0
      %v566 = vpop.f32.mrb[0].mxu0
      %v567 = vadd.f32 %v398, %v566
      %v568 = vpop.f32.mrb[0].mxu0
      %569 = vmatprep.mubr.bf16.mxu0 0
      %570 = vmatmul.mubr.bf16.gmra.mrb[0].mxu0 %v481
      %v571 = vpop.f32.mrb[0].mxu0
      %v572 = vadd.f32 %v403, %v571
      %v573 = vpop.f32.mrb[0].mxu0
      %v574 = vpop.f32.mrb[0].mxu0
      %v575 = vadd.f32 %v406, %v574
      %v576 = vpop.f32.mrb[0].mxu0
      %577 = vmatprep.mubr.bf16.mxu0 0
      %578 = vmatmul.mubr.bf16.gmra.mrb[0].mxu0 %v484
      %v579 = vpop.f32.mrb[0].mxu0
      %v580 = vadd.f32 %v411, %v579
      %v581 = vpop.f32.mrb[0].mxu0
      %v582 = vpop.f32.mrb[0].mxu0
      %v583 = vadd.f32 %v414, %v582
      %v584 = vpop.f32.mrb[0].mxu0
      %585 = vdwg.mxu0
      %s586 = scalar_lea.vmem %s197, 16
      %v587 = vld [vmem:[%s586] sm:$0xf]
      %v588 = vld [vmem:[%s586 + $0x4] sm:$0xf]
      %v589 = vld [vmem:[%s586 + $0x8] sm:$0xf]
      %v590 = vld [vmem:[%s586 + $0xc] sm:$0xf]
      %v591 = vld [vmem:[%s586 + $0x10] sm:$0xf]
      %v592 = vld [vmem:[%s586 + $0x14] sm:$0xf]
      %v593 = vld [vmem:[%s586 + $0x18] sm:$0xf]
      %v594 = vld [vmem:[%s586 + $0x1c] sm:$0xf]
      %v595 = vld [vmem:[%s586 + $0x20] sm:$0xf]
      %v596 = vld [vmem:[%s586 + $0x24] sm:$0xf]
      %v597 = vld [vmem:[%s586 + $0x28] sm:$0xf]
      %v598 = vld [vmem:[%s586 + $0x2c] sm:$0xf]
      %v599 = vld [vmem:[%s586 + $0x30] sm:$0xf]
      %v600 = vld [vmem:[%s586 + $0x34] sm:$0xf]
      %v601 = vld [vmem:[%s586 + $0x38] sm:$0xf]
      %v602 = vld [vmem:[%s586 + $0x3c] sm:$0xf]
      %s603 = scalar_lea.vmem %s1, 16
      %v604 = vld [vmem:[%s603] sm:$0xf]
      %v605 = vld [vmem:[%s603 + $0x4] sm:$0x3]
      %v622 = vunpack.c.l.b16 %v587
      %v623 = vunpack.c.l.b16 %v588
      %v624 = vunpack.c.l.b16 %v589
      %v625 = vunpack.c.l.b16 %v590
      %v626 = vunpack.c.l.b16 %v591
      %v627 = vunpack.c.l.b16 %v592
      %v628 = vunpack.c.l.b16 %v593
      %v629 = vunpack.c.l.b16 %v594
      %v630 = vunpack.c.l.b16 %v595
      %v631 = vunpack.c.l.b16 %v596
      %v632 = vunpack.c.l.b16 %v597
      %v633 = vunpack.c.l.b16 %v598
      %v634 = vunpack.c.l.b16 %v599
      %v635 = vunpack.c.l.b16 %v600
      %v636 = vunpack.c.l.b16 %v601
      %v637 = vunpack.c.l.b16 %v602
      %v638 = vpack.c.b16 %v623, %v622
      %v639 = vpack.c.b16 %v625, %v624
      %v640 = vpack.c.b16 %v627, %v626
      %v641 = vpack.c.b16 %v629, %v628
      %v642 = vpack.c.b16 %v631, %v630
      %v643 = vpack.c.b16 %v633, %v632
      %v644 = vpack.c.b16 %v635, %v634
      %v645 = vpack.c.b16 %v637, %v636
      %v648 = vunpack.c.l.b16 %v604
      %v649 = vunpack.c.l.b16 %v605
      %v650 = vpack.c.b16 %v649, %v648
      %v652 = vsel %vm291, %v638, 0
      %v655 = vsel %vm291, %v639, 0
      %v658 = vsel %vm291, %v640, 0
      %v661 = vsel %vm291, %v641, 0
      %v664 = vsel %vm291, %v642, 0
      %v667 = vsel %vm291, %v643, 0
      %v670 = vsel %vm291, %v644, 0
      %v673 = vsel %vm291, %v645, 0
      %v676 = vsel %vm316, %v650, 0
      %678 = vmatprep.subr.bf16.mxu0 0
      %679 = vmatpush1.bf16.msra.mxu0 %v676
      %680 = vmatprep.subr.bf16.mxu0 0
      %681 = vmatpush1.bf16.msra.mxu0 0
      %682 = vmatprep.subr.bf16.mxu0 0
      %683 = vmatpush1.bf16.msra.mxu0 0
      %684 = vmatprep.subr.bf16.mxu0 0
      %685 = vmatpush1.bf16.msra.mxu0 0
      %686 = vmatprep.subr.bf16.mxu0 0
      %687 = vmatpush1.bf16.msra.mxu0 0
      %688 = vmatprep.subr.bf16.mxu0 0
      %689 = vmatpush1.bf16.msra.mxu0 0
      %690 = vmatprep.subr.bf16.mxu0 0
      %691 = vmatpush1.bf16.msra.mxu0 0
      %692 = vmatprep.subr.bf16.mxu0 0
      %693 = vmatpush1.bf16.msra.mxu0 0
      %694 = vmatprep.subr.bf16.mxu0 0
      %695 = vmatpush1.bf16.msra.mxu0 0
      %696 = vmatprep.subr.bf16.mxu0 0
      %697 = vmatpush1.bf16.msra.mxu0 0
      %698 = vmatprep.subr.bf16.mxu0 0
      %699 = vmatpush1.bf16.msra.mxu0 0
      %700 = vmatprep.subr.bf16.mxu0 0
      %701 = vmatpush1.bf16.msra.mxu0 0
      %702 = vmatprep.subr.bf16.mxu0 0
      %703 = vmatpush1.bf16.msra.mxu0 0
      %704 = vmatprep.subr.bf16.mxu0 0
      %705 = vmatpush1.bf16.msra.mxu0 0
      %706 = vmatprep.subr.bf16.mxu0 0
      %707 = vmatpush1.bf16.msra.mxu0 0
      %708 = vmatprep.subr.bf16.mxu0 0
      %709 = vmatpush1.bf16.msra.mxu0 0
      %710 = vmatprep.mubr.bf16.mxu0 0
      %711 = vmatmul.mubr.bf16.gmra.mrb[0].mxu0 %v652
      %v712 = vpop.f32.mrb[0].mxu0
      %v713 = vadd.f32 0.0, %v712
      %v714 = vpop.f32.mrb[0].mxu0
      %v715 = vpop.f32.mrb[0].mxu0
      %v716 = vadd.f32 0.0, %v715
      %v717 = vpop.f32.mrb[0].mxu0
      %718 = vmatprep.mubr.bf16.mxu0 0
      %719 = vmatmul.mubr.bf16.gmra.mrb[0].mxu0 %v655
      %v720 = vpop.f32.mrb[0].mxu0
      %v721 = vadd.f32 0.0, %v720
      %v722 = vpop.f32.mrb[0].mxu0
      %v723 = vpop.f32.mrb[0].mxu0
      %v724 = vadd.f32 0.0, %v723
      %v725 = vpop.f32.mrb[0].mxu0
      %726 = vmatprep.mubr.bf16.mxu0 0
      %727 = vmatmul.mubr.bf16.gmra.mrb[0].mxu0 %v658
      %v728 = vpop.f32.mrb[0].mxu0
      %v729 = vadd.f32 0.0, %v728
      %v730 = vpop.f32.mrb[0].mxu0
      %v731 = vpop.f32.mrb[0].mxu0
      %v732 = vadd.f32 0.0, %v731
      %v733 = vpop.f32.mrb[0].mxu0
      %734 = vmatprep.mubr.bf16.mxu0 0
      %735 = vmatmul.mubr.bf16.gmra.mrb[0].mxu0 %v661
      %v736 = vpop.f32.mrb[0].mxu0
      %v737 = vadd.f32 0.0, %v736
      %v738 = vpop.f32.mrb[0].mxu0
      %v739 = vpop.f32.mrb[0].mxu0
      %v740 = vadd.f32 0.0, %v739
      %v741 = vpop.f32.mrb[0].mxu0
      %742 = vmatprep.mubr.bf16.mxu0 0
      %743 = vmatmul.mubr.bf16.gmra.mrb[0].mxu0 %v664
      %v744 = vpop.f32.mrb[0].mxu0
      %v745 = vadd.f32 0.0, %v744
      %v746 = vpop.f32.mrb[0].mxu0
      %v747 = vpop.f32.mrb[0].mxu0
      %v748 = vadd.f32 0.0, %v747
      %v749 = vpop.f32.mrb[0].mxu0
      %750 = vmatprep.mubr.bf16.mxu0 0
      %751 = vmatmul.mubr.bf16.gmra.mrb[0].mxu0 %v667
      %v752 = vpop.f32.mrb[0].mxu0
      %v753 = vadd.f32 0.0, %v752
      %v754 = vpop.f32.mrb[0].mxu0
      %v755 = vpop.f32.mrb[0].mxu0
      %v756 = vadd.f32 0.0, %v755
      %v757 = vpop.f32.mrb[0].mxu0
      %758 = vmatprep.mubr.bf16.mxu0 0
      %759 = vmatmul.mubr.bf16.gmra.mrb[0].mxu0 %v670
      %v760 = vpop.f32.mrb[0].mxu0
      %v761 = vadd.f32 0.0, %v760
      %v762 = vpop.f32.mrb[0].mxu0
      %v763 = vpop.f32.mrb[0].mxu0
      %v764 = vadd.f32 0.0, %v763
      %v765 = vpop.f32.mrb[0].mxu0
      %766 = vmatprep.mubr.bf16.mxu0 0
      %767 = vmatmul.mubr.bf16.gmra.mrb[0].mxu0 %v673
      %v768 = vpop.f32.mrb[0].mxu0
      %v769 = vadd.f32 0.0, %v768
      %v770 = vpop.f32.mrb[0].mxu0
      %v771 = vpop.f32.mrb[0].mxu0
      %v772 = vadd.f32 0.0, %v771
      %v773 = vpop.f32.mrb[0].mxu0
      %774 = vdwg.mxu0
      %v775 = vadd.f32 %v524, %v713
      %v776 = vadd.f32 %v527, %v716
      %v777 = vadd.f32 %v532, %v721
      %v778 = vadd.f32 %v535, %v724
      %v779 = vadd.f32 %v540, %v729
      %v780 = vadd.f32 %v543, %v732
      %v781 = vadd.f32 %v548, %v737
      %v782 = vadd.f32 %v551, %v740
      %v783 = vadd.f32 %v556, %v745
      %v784 = vadd.f32 %v559, %v748
      %v785 = vadd.f32 %v564, %v753
      %v786 = vadd.f32 %v567, %v756
      %v787 = vadd.f32 %v572, %v761
      %v788 = vadd.f32 %v575, %v764
      %v789 = vadd.f32 %v580, %v769
      %v790 = vadd.f32 %v583, %v772
      %v791 = vld [vmem:[%s2] sm:$0x1]
      %v793 = vlaneseq
      %v794 = vshrl.u32 %v793, 7
      %v795 = vsub.s32 0, %v794
      %v796 = vrot.slane %v791, %v795
      %v798 = vadd.f32 %v775, %v796
      %v799 = vadd.f32 %v776, %v796
      %v800 = vadd.f32 %v777, %v796
      %v801 = vadd.f32 %v778, %v796
      %v802 = vadd.f32 %v779, %v796
      %v803 = vadd.f32 %v780, %v796
      %v804 = vadd.f32 %v781, %v796
      %v805 = vadd.f32 %v782, %v796
      %v806 = vadd.f32 %v783, %v796
      %v807 = vadd.f32 %v784, %v796
      %v808 = vadd.f32 %v785, %v796
      %v809 = vadd.f32 %v786, %v796
      %v810 = vadd.f32 %v787, %v796
      %v811 = vadd.f32 %v788, %v796
      %v812 = vadd.f32 %v789, %v796
      %v813 = vadd.f32 %v790, %v796
      %v814 = vmax.f32 %v798, 0.0
      %v815 = vmax.f32 %v799, 0.0
      %v816 = vmax.f32 %v800, 0.0
      %v817 = vmax.f32 %v801, 0.0
      %v818 = vmax.f32 %v802, 0.0
      %v819 = vmax.f32 %v803, 0.0
      %v820 = vmax.f32 %v804, 0.0
      %v821 = vmax.f32 %v805, 0.0
      %v822 = vmax.f32 %v806, 0.0
      %v823 = vmax.f32 %v807, 0.0
      %v824 = vmax.f32 %v808, 0.0
      %v825 = vmax.f32 %v809, 0.0
      %v826 = vmax.f32 %v810, 0.0
      %v827 = vmax.f32 %v811, 0.0
      %v828 = vmax.f32 %v812, 0.0
      %v829 = vmax.f32 %v813, 0.0
      %v830 = vpack.c.bf16 %v815, %v814
      %v831 = vpack.c.bf16 %v817, %v816
      %v832 = vpack.c.bf16 %v819, %v818
      %v833 = vpack.c.bf16 %v821, %v820
      %v834 = vpack.c.bf16 %v823, %v822
      %v835 = vpack.c.bf16 %v825, %v824
      %v836 = vpack.c.bf16 %v827, %v826
      %v837 = vpack.c.bf16 %v829, %v828
      %v846 = vunpack.c.l.b16 %v830
      %v847 = vunpack.c.h.b16 %v830
      %v848 = vunpack.c.l.b16 %v831
      %v849 = vunpack.c.h.b16 %v831
      %v850 = vunpack.c.l.b16 %v832
      %v851 = vunpack.c.h.b16 %v832
      %v852 = vunpack.c.l.b16 %v833
      %v853 = vunpack.c.h.b16 %v833
      %v854 = vunpack.c.l.b16 %v834
      %v855 = vunpack.c.h.b16 %v834
      %v856 = vunpack.c.l.b16 %v835
      %v857 = vunpack.c.h.b16 %v835
      %v858 = vunpack.c.l.b16 %v836
      %v859 = vunpack.c.h.b16 %v836
      %v860 = vunpack.c.l.b16 %v837
      %v861 = vunpack.c.h.b16 %v837
      %v862 = vpack.c.b16 %v846, %v846
      %v863 = vpack.c.b16 %v847, %v847
      %v864 = vpack.c.b16 %v848, %v848
      %v865 = vpack.c.b16 %v849, %v849
      %v866 = vpack.c.b16 %v850, %v850
      %v867 = vpack.c.b16 %v851, %v851
      %v868 = vpack.c.b16 %v852, %v852
      %v869 = vpack.c.b16 %v853, %v853
      %v870 = vpack.c.b16 %v854, %v854
      %v871 = vpack.c.b16 %v855, %v855
      %v872 = vpack.c.b16 %v856, %v856
      %v873 = vpack.c.b16 %v857, %v857
      %v874 = vpack.c.b16 %v858, %v858
      %v875 = vpack.c.b16 %v859, %v859
      %v876 = vpack.c.b16 %v860, %v860
      %v877 = vpack.c.b16 %v861, %v861
      %vm894 = vcmask 60416
      %895 = vst.msk [vmem:[%s206] sm:$0xf] %vm894, %v862
      %896 = vst.msk [vmem:[%s206 + $0x4] sm:$0xf] %vm894, %v863
      %897 = vst.msk [vmem:[%s206 + $0x8] sm:$0xf] %vm894, %v864
      %898 = vst.msk [vmem:[%s206 + $0xc] sm:$0xf] %vm894, %v865
      %899 = vst.msk [vmem:[%s206 + $0x10] sm:$0xf] %vm894, %v866
      %900 = vst.msk [vmem:[%s206 + $0x14] sm:$0xf] %vm894, %v867
      %901 = vst.msk [vmem:[%s206 + $0x18] sm:$0xf] %vm894, %v868
      %902 = vst.msk [vmem:[%s206 + $0x1c] sm:$0xf] %vm894, %v869
      %903 = vst.msk [vmem:[%s206 + $0x20] sm:$0xf] %vm894, %v870
      %904 = vst.msk [vmem:[%s206 + $0x24] sm:$0xf] %vm894, %v871
      %905 = vst.msk [vmem:[%s206 + $0x28] sm:$0xf] %vm894, %v872
      %906 = vst.msk [vmem:[%s206 + $0x2c] sm:$0xf] %vm894, %v873
      %907 = vst.msk [vmem:[%s206 + $0x30] sm:$0xf] %vm894, %v874
      %908 = vst.msk [vmem:[%s206 + $0x34] sm:$0xf] %vm894, %v875
      %909 = vst.msk [vmem:[%s206 + $0x38] sm:$0xf] %vm894, %v876
      %910 = vst.msk [vmem:[%s206 + $0x3c] sm:$0xf] %vm894, %v877
      %p911 = scmp.lt.s32.totalorder %s18, 1
      %s912 = scalar_select %p911, %s18, 1
      %p913 = scmp.lt.s32.totalorder %s19, 1
      %s914 = scalar_select %p913, %s19, 1
      %s915 = smul.addr %s914, 16
      %s916 = smul.addr %s912, 32
      %s917 = sadd.s32 %s915, %s916
      %s918 = smul.addr %s917, 4
      %s919 = scalar_lea.vmem %s3, %s918
      // Predicated region
      $region33: #{tpu_custom_call.1} parent=31 // pred_check
        %p920 = pneg %p116
      $region34: #{tpu_custom_call.1} parent=31 // pred_check_branch
        %922 = sbr.rel (%p920) target = $region36
      $region35: #{tpu_custom_call.1} parent=31 // pred_region
        _
      $region36: #{tpu_custom_call.1} parent=31 // pred_fallthru
        _
    $region32: #{tpu_custom_call.1} parent=5 // pred_fallthru
      _
    %p923 = scmp.le.s32.totalorder 2, %s9
    // Predicated region
    $region37: #{tpu_custom_call.1} parent=5 // pred_check
      %p924 = pneg %p923
    $region38: #{tpu_custom_call.1} parent=5 // pred_check_branch
      %926 = sbr.rel (%p924) target = $region40
    $region39: #{tpu_custom_call.1} parent=5 // pred_region
      %s927 = ssub.s32 %s9, 2
      // Predicated region
      $region41: #{tpu_custom_call.1} parent=39 // pred_check
        %p928 = pneg %p122
      $region42: #{tpu_custom_call.1} parent=39 // pred_check_branch
        %930 = sbr.rel (%p928) target = $region44
      $region43: #{tpu_custom_call.1} parent=39 // pred_region
        %p931 = scmp.lt.s32.totalorder %s20, 1
        %s932 = scalar_select %p931, %s20, 1
        %p933 = scmp.lt.s32.totalorder %s21, 1
        %s934 = scalar_select %p933, %s21, 1
        %s935 = smul.addr %s934, 16
        %s936 = smul.addr %s932, 32
        %s937 = sadd.s32 %s935, %s936
        %s938 = smul.addr %s937, 4
        %s939 = scalar_lea.vmem %s3, %s938
      $region44: #{tpu_custom_call.1} parent=39 // pred_fallthru
        _
    $region40: #{tpu_custom_call.1} parent=5 // pred_fallthru
      _
  $region6: #{tpu_custom_call.1} parent=0 // loop_footer
    %s13 = sadd.s32 1, %s9
  $region7: #{tpu_custom_call.1} parent=0 // loop_footer_branch
    %8 = sbr.rel target = $region3
  $region8: #{tpu_custom_call.1} parent=0 // loop_exit
    _

</llo_original>
